<compile_context>
chip_gen: v6e
topology: v6e:2x2x1
jax: 0.10.0
libtpu: 0.0.40
codegen_flags: <defaults>
</compile_context>

<pallas_src>
import functools

import jax
import jax.numpy as jnp
from jax import lax
from jax.experimental import pallas as pl
from jax.experimental.pallas import tpu as pltpu


_LANE = 128


def _round_up(x, m):
    return ((x + m - 1) // m) * m


# ---------------------------------------------------------------------------
# Kernel
# ---------------------------------------------------------------------------
def _decoder_kernel(z_ref, cat_ref, lib_ref, w_ref,
                    scale_ref, rate_ref, drop_ref,
                    *, n_cat, n_output, n_pad, approx_recip):
    # z_ref:   (tb, n_input)         latent tile
    # cat_ref: (tb, 1) int32         categorical covariate
    # lib_ref: (tb, 1)               library (log-space)
    # w_ref:   (K, 2*n_pad)          fused, lane-padded [Wf | Wd], K = n_input + n_cat
    z = z_ref[...]
    tb = z.shape[0]

    # Covariate injection in VMEM: x = [z | one_hot(cat)] (K fits one lane group).
    oh = (cat_ref[...] ==
          lax.broadcasted_iota(jnp.int32, (tb, n_cat), 1)).astype(z.dtype)
    x = jnp.concatenate([z, oh], axis=-1)

    # Single fused MXU matmul for both linears, f32 accumulation.
    raw = jnp.dot(x, w_ref[...], preferred_element_type=jnp.float32)

    raw_scale = raw[:, :n_pad]          # lane-aligned split (n_pad % 128 == 0)
    raw_drop = raw[:, n_pad:]

    if n_pad != n_output:
        # Mask padded gene columns out of the softmax (exp(-inf) -> 0).
        col = lax.broadcasted_iota(jnp.int32, (tb, n_pad), 1)
        raw_scale = jnp.where(col < n_output, raw_scale, -jnp.inf)

    # Row softmax, all in f32; reciprocal runs on the otherwise-idle EUP.
    m = jnp.max(raw_scale, axis=-1, keepdims=True)
    e = jnp.exp(raw_scale - m)
    denom = jnp.sum(e, axis=-1, keepdims=True)
    px_scale = e * pl.reciprocal(denom, approx=approx_recip)

    scale_ref[...] = px_scale.astype(scale_ref.dtype)
    rate_ref[...] = (jnp.exp(lib_ref[...]) * px_scale).astype(rate_ref.dtype)
    drop_ref[...] = raw_drop.astype(drop_ref.dtype)


# ---------------------------------------------------------------------------
# Weight preparation (hoisted out of the per-call path: do this once at init)
# ---------------------------------------------------------------------------
def prepare_decoder_weights(Wf, Wd):
    """Fuse + lane-pad the two linear weights (call once, reuse every forward).

    Wf, Wd: (n_input + n_cat, n_output), stored transposed vs torch.
    Returns (W_fused, n_output, n_pad) with W_fused: (K, 2 * n_pad) and
    n_pad = round_up(n_output, 128); padded columns are zero.
    """
    assert Wf.shape == Wd.shape
    _, n_output = Wf.shape
    n_pad = _round_up(n_output, _LANE)
    if n_pad != n_output:
        pad = ((0, 0), (0, n_pad - n_output))
        Wf = jnp.pad(Wf, pad)
        Wd = jnp.pad(Wd, pad)
    W = jnp.concatenate([Wf, Wd], axis=1)   # (K, 2*n_pad)
    return W, n_output, n_pad


# ---------------------------------------------------------------------------
# Tiling / VMEM budgeting
# ---------------------------------------------------------------------------
def _vmem_capacity_bytes():
    try:
        return int(pltpu.get_tpu_info().vmem_capacity_bytes)
    except Exception:
        return 64 * 1024 * 1024   # conservative default (v7x per-TC VMEM)


def _pick_tile_b(B, n_pad, out_itemsize, w_bytes, in_row_bytes, vmem_cap):
    # Sublane multiple of the output dtype (f32 -> 8, bf16/f16 -> 16).
    sub = 8 if out_itemsize >= 4 else 16
    # Per-row VMEM: 3 double-buffered output tiles + f32 intermediates
    # (raw has 2*n_pad cols, plus e and px_scale) + double-buffered input rows.
    per_row = (3 * n_pad * out_itemsize * 2) + (4 * n_pad * 4) + (2 * in_row_bytes)
    budget = max(8 * 1024 * 1024, int(0.70 * vmem_cap) - w_bytes)
    tb = max(sub, min(budget // per_row, 512))
    if tb >= 2 * _LANE:
        tb = (tb // _LANE) * _LANE          # MXU-friendly M granularity
    else:
        tb = max(sub, (tb // sub) * sub)
    tb = min(tb, _round_up(B, sub))
    # Megacore: v7x has 2 TensorCores and "parallel" shards the batch axis.
    # Guarantee >= 2 grid steps when the batch allows it; one extra pipeline
    # step (~0.35 us) is noise on single-core chips.
    if tb >= B and B >= 2 * sub:
        tb = _round_up((B + 1) // 2, sub)
    return int(tb), sub


# ---------------------------------------------------------------------------
# Forward wrapper
# ---------------------------------------------------------------------------
def linear_decoder_scvi(z, library, cat, W_fused, n_cat, n_output, *,
                        tile_b=None, out_dtype=jnp.float32,
                        approx_recip=False, single_buffer_weights=True):
    """JAX/Pallas equivalent of LinearDecoderSCVI.forward(dispersion, z, library, cat).

    W_fused comes from prepare_decoder_weights(Wf, Wd) (precomputed once).
    Returns (px_scale, px_r, px_rate, px_dropout) with px_r = None.
    """
    if cat.ndim == 1:
        cat = cat[:, None]
    if library.ndim == 1:
        library = library[:, None]
    cat = cat.astype(jnp.int32)

    B, n_input = z.shape
    K, two_n_pad = W_fused.shape
    n_pad = two_n_pad // 2
    assert K == n_input + n_cat, "W_fused rows must equal n_input + n_cat"
    assert n_pad >= n_output

    out_itemsize = jnp.dtype(out_dtype).itemsize
    w_itemsize = jnp.dtype(W_fused.dtype).itemsize

    vmem_cap = _vmem_capacity_bytes()
    w_bytes = K * two_n_pad * w_itemsize * (1 if single_buffer_weights else 2)
    in_row_bytes = (n_input * z.dtype.itemsize + 4 + library.dtype.itemsize)

    if tile_b is None:
        tb, _ = _pick_tile_b(B, n_pad, out_itemsize, w_bytes, in_row_bytes, vmem_cap)
    else:
        sub = 8 if out_itemsize >= 4 else 16
        tb = max(sub, (min(int(tile_b), B) // sub) * sub)

    grid = (pl.cdiv(B, tb),)

    kernel = functools.partial(
        _decoder_kernel, n_cat=n_cat, n_output=n_output, n_pad=n_pad,
        approx_recip=approx_recip)

    out_shape = (
        jax.ShapeDtypeStruct((B, n_pad), out_dtype),   # px_scale (padded)
        jax.ShapeDtypeStruct((B, n_pad), out_dtype),   # px_rate  (padded)
        jax.ShapeDtypeStruct((B, n_pad), out_dtype),   # px_dropout (padded)
    )

    # VMEM footprint (double-buffered outputs + f32 intermediates + inputs +
    # weight), capped under the physical capacity.
    vmem_est = (tb * (3 * n_pad * out_itemsize * 2 + 4 * n_pad * 4 + 2 * in_row_bytes)
                + w_bytes)
    vmem_limit = int(min(max(32 * 1024 * 1024, int(1.25 * vmem_est)),
                         int(0.90 * vmem_cap)))

    # Bandwidth-bound hint for the XLA scheduler.
    bytes_accessed = (z.size * z.dtype.itemsize + cat.size * 4
                      + library.size * library.dtype.itemsize
                      + K * two_n_pad * w_itemsize
                      + 3 * B * n_pad * out_itemsize)
    cost = pl.CostEstimate(flops=2 * B * K * two_n_pad,
                           transcendentals=B * (n_pad + 1),
                           bytes_accessed=bytes_accessed)

    def build_call(use_single_buffer):
        w_kwargs = {}
        if use_single_buffer:
            # Constant index_map -> nothing to prefetch; reclaim the 2nd buffer.
            w_kwargs["pipeline_mode"] = pl.Buffered(1)
        z_spec = pl.BlockSpec((tb, n_input), lambda i: (i, 0))
        cat_spec = pl.BlockSpec((tb, 1), lambda i: (i, 0))
        lib_spec = pl.BlockSpec((tb, 1), lambda i: (i, 0))
        w_spec = pl.BlockSpec((K, two_n_pad), lambda i: (0, 0), **w_kwargs)
        out_spec = pl.BlockSpec((tb, n_pad), lambda i: (i, 0))
        return pl.pallas_call(
            kernel,
            out_shape=out_shape,
            grid_spec=pltpu.PrefetchScalarGridSpec(
                num_scalar_prefetch=0,
                grid=grid,
                in_specs=[z_spec, cat_spec, lib_spec, w_spec],
                out_specs=[out_spec, out_spec, out_spec],
            ),
            compiler_params=pltpu.CompilerParams(
                dimension_semantics=("parallel",),
                vmem_limit_bytes=vmem_limit,
            ),
            cost_estimate=cost,
        )

    try:
        px_scale, px_rate, px_dropout = build_call(single_buffer_weights)(
            z, cat, library, W_fused)
    except Exception:
        if not single_buffer_weights:
            raise
        px_scale, px_rate, px_dropout = build_call(False)(z, cat, library, W_fused)

    if n_pad != n_output:
        px_scale = px_scale[:, :n_output]
        px_rate = px_rate[:, :n_output]
        px_dropout = px_dropout[:, :n_output]

    px_r = None
    return px_scale, px_r, px_rate, px_dropout


# ---------------------------------------------------------------------------
# Pure-JAX reference
# ---------------------------------------------------------------------------
def _reference(z, library, cat, Wf, Wd, n_cat):
    onehot = jax.nn.one_hot(jnp.squeeze(cat, -1), n_cat, dtype=z.dtype)
    x = jnp.concatenate([z, onehot], axis=-1)
    raw_scale = x @ Wf
    px_scale = jax.nn.softmax(raw_scale, axis=-1)
    px_dropout = x @ Wd
    px_rate = jnp.exp(library) * px_scale
    return px_scale, None, px_rate, px_dropout


if __name__ == "__main__":
    key = jax.random.PRNGKey(0)

    # ----- Case 1: small, lane-aligned n_output (grid = 1) -----
    B, n_input, n_output, n_cat = 8, 16, 128, 3
    in_dim = n_input + n_cat
    kz, kl, kc, kwf, kwd, k2 = jax.random.split(key, 6)

    z = jax.random.normal(kz, (B, n_input), dtype=jnp.float32)
    library = jax.random.normal(kl, (B, 1), dtype=jnp.float32)
    cat = jax.random.randint(kc, (B, 1), 0, n_cat, dtype=jnp.int32)

    bound = 1.0 / jnp.sqrt(in_dim)
    Wf = jax.random.uniform(kwf, (in_dim, n_output), jnp.float32, -bound, bound)
    Wd = jax.random.uniform(kwd, (in_dim, n_output), jnp.float32, -bound, bound)

    W_fused, _, _ = prepare_decoder_weights(Wf, Wd)   # hoisted: done once

    px_scale, px_r, px_rate, px_dropout = linear_decoder_scvi(
        z, library, cat, W_fused, n_cat, n_output)
    jax.block_until_ready((px_scale, px_rate, px_dropout))

    rs, _, rr, rd = _reference(z, library, cat, Wf, Wd, n_cat)
    assert jnp.allclose(px_scale, rs, atol=1e-5, rtol=1e-4)
    assert jnp.allclose(px_rate, rr, atol=1e-5, rtol=1e-4)
    assert jnp.allclose(px_dropout, rd, atol=1e-5, rtol=1e-4)
    assert px_r is None

    # ----- Case 2: non-lane-aligned n_output + grid > 1 (padding + mask path) -----
    B2, n_output2 = 24, 96
    kz2, kl2, kc2, kwf2, kwd2 = jax.random.split(k2, 5)
    z2 = jax.random.normal(kz2, (B2, n_input), dtype=jnp.float32)
    lib2 = jax.random.normal(kl2, (B2, 1), dtype=jnp.float32)
    cat2 = jax.random.randint(kc2, (B2, 1), 0, n_cat, dtype=jnp.int32)
    Wf2 = jax.random.uniform(kwf2, (in_dim, n_output2), jnp.float32, -bound, bound)
    Wd2 = jax.random.uniform(kwd2, (in_dim, n_output2), jnp.float32, -bound, bound)
    W2, _, _ = prepare_decoder_weights(Wf2, Wd2)

    s2, _, r2, d2 = linear_decoder_scvi(
        z2, lib2, cat2, W2, n_cat, n_output2, tile_b=8)
    jax.block_until_ready((s2, r2, d2))
    rs2, _, rr2, rd2 = _reference(z2, lib2, cat2, Wf2, Wd2, n_cat)
    assert jnp.allclose(s2, rs2, atol=1e-5, rtol=1e-4)
    assert jnp.allclose(r2, rr2, atol=1e-5, rtol=1e-4)
    assert jnp.allclose(d2, rd2, atol=1e-5, rtol=1e-4)

    # ----- Case 3: bf16 weights/activations + bf16 outputs (bandwidth path) -----
    bs, _, br, bd = linear_decoder_scvi(
        z.astype(jnp.bfloat16), library, cat,
        W_fused.astype(jnp.bfloat16), n_cat, n_output,
        out_dtype=jnp.bfloat16)
    jax.block_until_ready((bs, br, bd))
    assert jnp.allclose(bs.astype(jnp.float32), rs, atol=5e-2, rtol=5e-2)
    assert jnp.allclose(br.astype(jnp.float32), rr, atol=5e-2, rtol=5e-2)
    assert jnp.allclose(bd.astype(jnp.float32), rd, atol=5e-2, rtol=5e-2)

    print("KERNEL_OK")
</pallas_src>

<mosaic_0001>
module attributes {stable_mosaic.version = 11 : i64} {
  func.func @_decoder_kernel(%arg0: i32, %arg1: memref<8x16xf32, #tpu.memory_space<vmem>>, %arg2: memref<8x1xi32, #tpu.memory_space<vmem>>, %arg3: memref<8x1xf32, #tpu.memory_space<vmem>>, %arg4: memref<19x256xf32, #tpu.memory_space<vmem>>, %arg5: memref<8x128xf32, #tpu.memory_space<vmem>>, %arg6: memref<8x128xf32, #tpu.memory_space<vmem>>, %arg7: memref<8x128xf32, #tpu.memory_space<vmem>>) attributes {dimension_semantics = [#tpu.dimension_semantics<parallel>], iteration_bounds = array<i64: 1>, scalar_prefetch = 0 : i64, scratch_operands = 0 : i64, tpu.core_type = #tpu.core_type<tc>, window_params = [{transform_indices = @transform_0, window_bounds = array<i64: 8, 16>}, {transform_indices = @transform_1, window_bounds = array<i64: 8, 1>}, {transform_indices = @transform_2, window_bounds = array<i64: 8, 1>}, {pipeline_mode = #tpu.pipeline_mode<synchronous>, transform_indices = @transform_3, window_bounds = array<i64: 19, 256>}, {transform_indices = @transform_4, window_bounds = array<i64: 8, 128>}, {transform_indices = @transform_5, window_bounds = array<i64: 8, 128>}, {transform_indices = @transform_6, window_bounds = array<i64: 8, 128>}]} {
    %c0 = arith.constant 0 : index
    %c0_0 = arith.constant 0 : index
    %0 = vector.load %arg1[%c0, %c0_0] : memref<8x16xf32, #tpu.memory_space<vmem>>, vector<8x16xf32>
    %c0_1 = arith.constant 0 : index
    %c0_2 = arith.constant 0 : index
    %1 = vector.load %arg2[%c0_1, %c0_2] : memref<8x1xi32, #tpu.memory_space<vmem>>, vector<8x1xi32>
    %2 = tpu.iota {dimensions = array<i32: 1>} : vector<8x3xi32>
    %3 = vector.broadcast %1 : vector<8x1xi32> to vector<8x3xi32>
    %4 = arith.cmpi eq, %3, %2 : vector<8x3xi32>
    %5 = arith.extui %4 : vector<8x3xi1> to vector<8x3xi32>
    %6 = arith.sitofp %5 : vector<8x3xi32> to vector<8x3xf32>
    %7 = tpu.concatenate %0, %6 in 1 : vector<8x16xf32>, vector<8x3xf32> -> vector<8x19xf32>
    %c0_3 = arith.constant 0 : index
    %c0_4 = arith.constant 0 : index
    %8 = vector.load %arg4[%c0_3, %c0_4] : memref<19x256xf32, #tpu.memory_space<vmem>>, vector<19x256xf32>
    %cst = arith.constant dense<0.000000e+00> : vector<8x256xf32>
    %9 = tpu.matmul %7, %8, %cst {dimension_numbers = #tpu.dot_dimension_numbers<[1], [0], [0], [1], [0, 0, 1, 1], [], []>} : vector<8x19xf32>, vector<19x256xf32>, vector<8x256xf32> -> vector<8x256xf32>
    %10 = vector.extract_strided_slice %9 {offsets = [0, 0], sizes = [8, 128], strides = [1, 1]} : vector<8x256xf32> to vector<8x128xf32>
    %11 = vector.extract_strided_slice %9 {offsets = [0, 128], sizes = [8, 128], strides = [1, 1]} : vector<8x256xf32> to vector<8x128xf32>
    %cst_5 = arith.constant dense<0xFF800000> : vector<8xf32>
    %12 = vector.multi_reduction <maximumf>, %10, %cst_5 [1] : vector<8x128xf32> to vector<8xf32>
    %13 = vector.shape_cast %12 : vector<8xf32> to vector<8x1xf32>
    %14 = vector.broadcast %13 : vector<8x1xf32> to vector<8x128xf32>
    %15 = arith.subf %10, %14 : vector<8x128xf32>
    %16 = math.exp %15 : vector<8x128xf32>
    %cst_6 = arith.constant dense<0.000000e+00> : vector<8xf32>
    %17 = vector.multi_reduction <add>, %16, %cst_6 [1] : vector<8x128xf32> to vector<8xf32>
    %18 = vector.shape_cast %17 : vector<8xf32> to vector<8x1xf32>
    %19 = tpu.reciprocal %18 : vector<8x1xf32> -> vector<8x1xf32>
    %20 = vector.broadcast %19 : vector<8x1xf32> to vector<8x128xf32>
    %21 = arith.mulf %16, %20 : vector<8x128xf32>
    %c0_7 = arith.constant 0 : index
    %c0_8 = arith.constant 0 : index
    %22 = vector.load %arg5[%c0_7, %c0_8] : memref<8x128xf32, #tpu.memory_space<vmem>>, vector<8x128xf32>
    tpu.vector_store %arg5[%c0_7, %c0_8], %21 {strides = array<i32>} : memref<8x128xf32, #tpu.memory_space<vmem>>, vector<8x128xf32>,
    %c0_9 = arith.constant 0 : index
    %c0_10 = arith.constant 0 : index
    %23 = vector.load %arg3[%c0_9, %c0_10] : memref<8x1xf32, #tpu.memory_space<vmem>>, vector<8x1xf32>
    %24 = math.exp %23 : vector<8x1xf32>
    %25 = vector.broadcast %24 : vector<8x1xf32> to vector<8x128xf32>
    %26 = arith.mulf %25, %21 : vector<8x128xf32>
    %c0_11 = arith.constant 0 : index
    %c0_12 = arith.constant 0 : index
    %27 = vector.load %arg6[%c0_11, %c0_12] : memref<8x128xf32, #tpu.memory_space<vmem>>, vector<8x128xf32>
    tpu.vector_store %arg6[%c0_11, %c0_12], %26 {strides = array<i32>} : memref<8x128xf32, #tpu.memory_space<vmem>>, vector<8x128xf32>,
    %c0_13 = arith.constant 0 : index
    %c0_14 = arith.constant 0 : index
    %28 = vector.load %arg7[%c0_13, %c0_14] : memref<8x128xf32, #tpu.memory_space<vmem>>, vector<8x128xf32>
    tpu.vector_store %arg7[%c0_13, %c0_14], %11 {strides = array<i32>} : memref<8x128xf32, #tpu.memory_space<vmem>>, vector<8x128xf32>,
    return
  }
  func.func @transform_0(%arg0: i32) -> (i32, i32) {
    %c0_i32 = arith.constant 0 : i32
    %c0_i32_0 = arith.constant 0 : i32
    return %arg0, %c0_i32 : i32, i32
  }
  func.func @transform_1(%arg0: i32) -> (i32, i32) {
    %c0_i32 = arith.constant 0 : i32
    %c0_i32_0 = arith.constant 0 : i32
    return %arg0, %c0_i32 : i32, i32
  }
  func.func @transform_2(%arg0: i32) -> (i32, i32) {
    %c0_i32 = arith.constant 0 : i32
    %c0_i32_0 = arith.constant 0 : i32
    return %arg0, %c0_i32 : i32, i32
  }
  func.func @transform_3(%arg0: i32) -> (i32, i32) {
    %c0_i32 = arith.constant 0 : i32
    %c0_i32_0 = arith.constant 0 : i32
    %c0_i32_1 = arith.constant 0 : i32
    return %c0_i32, %c0_i32_0 : i32, i32
  }
  func.func @transform_4(%arg0: i32) -> (i32, i32) {
    %c0_i32 = arith.constant 0 : i32
    %c0_i32_0 = arith.constant 0 : i32
    return %arg0, %c0_i32 : i32, i32
  }
  func.func @transform_5(%arg0: i32) -> (i32, i32) {
    %c0_i32 = arith.constant 0 : i32
    %c0_i32_0 = arith.constant 0 : i32
    return %arg0, %c0_i32 : i32, i32
  }
  func.func @transform_6(%arg0: i32) -> (i32, i32) {
    %c0_i32 = arith.constant 0 : i32
    %c0_i32_0 = arith.constant 0 : i32
    return %arg0, %c0_i32 : i32, i32
  }
}

module attributes {stable_mosaic.version = 11 : i64} {
  func.func @_decoder_kernel(%arg0: i32, %arg1: memref<8x16xf32, #tpu.memory_space<vmem>>, %arg2: memref<8x1xi32, #tpu.memory_space<vmem>>, %arg3: memref<8x1xf32, #tpu.memory_space<vmem>>, %arg4: memref<19x256xf32, #tpu.memory_space<vmem>>, %arg5: memref<8x128xf32, #tpu.memory_space<vmem>>, %arg6: memref<8x128xf32, #tpu.memory_space<vmem>>, %arg7: memref<8x128xf32, #tpu.memory_space<vmem>>) attributes {dimension_semantics = [#tpu.dimension_semantics<parallel>], iteration_bounds = array<i64: 1>, scalar_prefetch = 0 : i64, scratch_operands = 0 : i64, tpu.core_type = #tpu.core_type<tc>, window_params = [{transform_indices = @transform_0, window_bounds = array<i64: 8, 16>}, {transform_indices = @transform_1, window_bounds = array<i64: 8, 1>}, {transform_indices = @transform_2, window_bounds = array<i64: 8, 1>}, {pipeline_mode = #tpu.pipeline_mode<synchronous>, transform_indices = @transform_3, window_bounds = array<i64: 19, 256>}, {transform_indices = @transform_4, window_bounds = array<i64: 8, 128>}, {transform_indices = @transform_5, window_bounds = array<i64: 8, 128>}, {transform_indices = @transform_6, window_bounds = array<i64: 8, 128>}]} {
    %c0 = arith.constant 0 : index
    %c0_0 = arith.constant 0 : index
    %0 = vector.load %arg1[%c0, %c0_0] : memref<8x16xf32, #tpu.memory_space<vmem>>, vector<8x16xf32>
    %c0_1 = arith.constant 0 : index
    %c0_2 = arith.constant 0 : index
    %1 = vector.load %arg2[%c0_1, %c0_2] : memref<8x1xi32, #tpu.memory_space<vmem>>, vector<8x1xi32>
    %2 = tpu.iota {dimensions = array<i32: 1>} : vector<8x3xi32>
    %3 = vector.broadcast %1 : vector<8x1xi32> to vector<8x3xi32>
    %4 = arith.cmpi eq, %3, %2 : vector<8x3xi32>
    %5 = arith.extui %4 : vector<8x3xi1> to vector<8x3xi32>
    %6 = arith.sitofp %5 : vector<8x3xi32> to vector<8x3xf32>
    %7 = tpu.concatenate %0, %6 in 1 : vector<8x16xf32>, vector<8x3xf32> -> vector<8x19xf32>
    %c0_3 = arith.constant 0 : index
    %c0_4 = arith.constant 0 : index
    %8 = vector.load %arg4[%c0_3, %c0_4] : memref<19x256xf32, #tpu.memory_space<vmem>>, vector<19x256xf32>
    %cst = arith.constant dense<0.000000e+00> : vector<8x256xf32>
    %9 = tpu.matmul %7, %8, %cst {dimension_numbers = #tpu.dot_dimension_numbers<[1], [0], [0], [1], [0, 0, 1, 1], [], []>} : vector<8x19xf32>, vector<19x256xf32>, vector<8x256xf32> -> vector<8x256xf32>
    %10 = vector.extract_strided_slice %9 {offsets = [0, 0], sizes = [8, 128], strides = [1, 1]} : vector<8x256xf32> to vector<8x128xf32>
    %11 = vector.extract_strided_slice %9 {offsets = [0, 128], sizes = [8, 128], strides = [1, 1]} : vector<8x256xf32> to vector<8x128xf32>
    %cst_5 = arith.constant dense<0xFF800000> : vector<8xf32>
    %12 = vector.multi_reduction <maximumf>, %10, %cst_5 [1] : vector<8x128xf32> to vector<8xf32>
    %13 = vector.shape_cast %12 : vector<8xf32> to vector<8x1xf32>
    %14 = vector.broadcast %13 : vector<8x1xf32> to vector<8x128xf32>
    %15 = arith.subf %10, %14 : vector<8x128xf32>
    %16 = math.exp %15 : vector<8x128xf32>
    %cst_6 = arith.constant dense<0.000000e+00> : vector<8xf32>
    %17 = vector.multi_reduction <add>, %16, %cst_6 [1] : vector<8x128xf32> to vector<8xf32>
    %18 = vector.shape_cast %17 : vector<8xf32> to vector<8x1xf32>
    %19 = tpu.reciprocal %18 : vector<8x1xf32> -> vector<8x1xf32>
    %20 = vector.broadcast %19 : vector<8x1xf32> to vector<8x128xf32>
    %21 = arith.mulf %16, %20 : vector<8x128xf32>
    %c0_7 = arith.constant 0 : index
    %c0_8 = arith.constant 0 : index
    %22 = vector.load %arg5[%c0_7, %c0_8] : memref<8x128xf32, #tpu.memory_space<vmem>>, vector<8x128xf32>
    tpu.vector_store %arg5[%c0_7, %c0_8], %21 {strides = array<i32>} : memref<8x128xf32, #tpu.memory_space<vmem>>, vector<8x128xf32>,
    %c0_9 = arith.constant 0 : index
    %c0_10 = arith.constant 0 : index
    %23 = vector.load %arg3[%c0_9, %c0_10] : memref<8x1xf32, #tpu.memory_space<vmem>>, vector<8x1xf32>
    %24 = math.exp %23 : vector<8x1xf32>
    %25 = vector.broadcast %24 : vector<8x1xf32> to vector<8x128xf32>
    %26 = arith.mulf %25, %21 : vector<8x128xf32>
    %c0_11 = arith.constant 0 : index
    %c0_12 = arith.constant 0 : index
    %27 = vector.load %arg6[%c0_11, %c0_12] : memref<8x128xf32, #tpu.memory_space<vmem>>, vector<8x128xf32>
    tpu.vector_store %arg6[%c0_11, %c0_12], %26 {strides = array<i32>} : memref<8x128xf32, #tpu.memory_space<vmem>>, vector<8x128xf32>,
    %c0_13 = arith.constant 0 : index
    %c0_14 = arith.constant 0 : index
    %28 = vector.load %arg7[%c0_13, %c0_14] : memref<8x128xf32, #tpu.memory_space<vmem>>, vector<8x128xf32>
    tpu.vector_store %arg7[%c0_13, %c0_14], %11 {strides = array<i32>} : memref<8x128xf32, #tpu.memory_space<vmem>>, vector<8x128xf32>,
    return
  }
  func.func @transform_0(%arg0: i32) -> (i32, i32) {
    %c0_i32 = arith.constant 0 : i32
    %c0_i32_0 = arith.constant 0 : i32
    return %arg0, %c0_i32 : i32, i32
  }
  func.func @transform_1(%arg0: i32) -> (i32, i32) {
    %c0_i32 = arith.constant 0 : i32
    %c0_i32_0 = arith.constant 0 : i32
    return %arg0, %c0_i32 : i32, i32
  }
  func.func @transform_2(%arg0: i32) -> (i32, i32) {
    %c0_i32 = arith.constant 0 : i32
    %c0_i32_0 = arith.constant 0 : i32
    return %arg0, %c0_i32 : i32, i32
  }
  func.func @transform_3(%arg0: i32) -> (i32, i32) {
    %c0_i32 = arith.constant 0 : i32
    %c0_i32_0 = arith.constant 0 : i32
    %c0_i32_1 = arith.constant 0 : i32
    return %c0_i32, %c0_i32_0 : i32, i32
  }
  func.func @transform_4(%arg0: i32) -> (i32, i32) {
    %c0_i32 = arith.constant 0 : i32
    %c0_i32_0 = arith.constant 0 : i32
    return %arg0, %c0_i32 : i32, i32
  }
  func.func @transform_5(%arg0: i32) -> (i32, i32) {
    %c0_i32 = arith.constant 0 : i32
    %c0_i32_0 = arith.constant 0 : i32
    return %arg0, %c0_i32 : i32, i32
  }
  func.func @transform_6(%arg0: i32) -> (i32, i32) {
    %c0_i32 = arith.constant 0 : i32
    %c0_i32_0 = arith.constant 0 : i32
    return %arg0, %c0_i32 : i32, i32
  }
}

</mosaic_0001>

<llo_original>
// kernel: tpu_custom_call.1
$region0: #{tpu_custom_call.1}
  #allocation0 [shape = 'u32[]', space=smem, size = 0x4, offset = 0x4, fixed_abs, tag = 'smem constant byte address 0x4 - core index']
  #allocation1 [shape = 'u32[144,128]{1,0:T(1,128)}', space=vmem, size = 0x12000, scoped, tag = 'internal scratch']
  %s0 = inlined_call_operand.vmem [shape: f32[8,16], index: 0, kind: input, shape index: {}]
  %s1 = inlined_call_operand.vmem [shape: s32[8,1], index: 1, kind: input, shape index: {}]
  %s2 = inlined_call_operand.vmem [shape: f32[8,1], index: 2, kind: input, shape index: {}]
  %s3 = inlined_call_operand.hbm [shape: f32[19,256], index: 3, kind: input, shape index: {}]
  %s4 = inlined_call_operand.hbm [shape: f32[8,128], index: 4, kind: output, shape index: {0}]
  %s5 = inlined_call_operand.hbm [shape: f32[8,128], index: 5, kind: output, shape index: {1}]
  %s6 = inlined_call_operand.hbm [shape: f32[8,128], index: 6, kind: output, shape index: {2}]
  %7 = xla_tuple %s4, %s5, %s6
  %s8 = sld [smem:[#allocation0]]
  $region46: #{tpu_custom_call.1} parent=0
    _
  %s10 = ssub.s32 1, %s8
  %s11 = scalar_select 0, %s10, %s8
  $region1: #{tpu_custom_call.1} parent=0
    #allocation2 [shape = 'u8[24576]{0}', space=vmem, size = 0x6000, scoped, tag = 'input window, operand 3, single buffered']
    #allocation3 [shape = 's32[1]{0}', space=sflag, size = 0x4, scoped, tag = 'scoped memory for tpu_custom_call.1']
    #allocation4 [shape = 's32[1]{0}', space=sflag, size = 0x4, scoped, tag = 'scoped memory for tpu_custom_call.1']
    #allocation5 [shape = 'u8[4096]{0}', space=vmem, size = 0x1000, scoped, tag = 'output window, operand 0, single buffered']
    #allocation6 [shape = 'u8[4096]{0}', space=vmem, size = 0x1000, scoped, tag = 'output window, operand 1, single buffered']
    #allocation7 [shape = 's32[1]{0}', space=sflag, size = 0x4, scoped, tag = 'scoped memory for tpu_custom_call.1']
    #allocation8 [shape = 'u8[4096]{0}', space=vmem, size = 0x1000, scoped, tag = 'output window, operand 2, single buffered']
    %12 = vsyncpa [#allocation3], 0
    %13 = vsyncpa [#allocation4], 0
    %14 = vsyncpa [#allocation7], 0
    // Predicated region
    $region2: #{tpu_custom_call.1} parent=1 // pred_check
      _
    $region3: #{tpu_custom_call.1} parent=1 // pred_check_branch
      %16 = sbr.rel (0) target = $region5
    $region4: #{tpu_custom_call.1} parent=1 // pred_region
      _
    $region5: #{tpu_custom_call.1} parent=1 // pred_fallthru
      _
    // Predicated region
    $region6: #{tpu_custom_call.1} parent=1 // pred_check
      _
    $region7: #{tpu_custom_call.1} parent=1 // pred_check_branch
      %18 = sbr.rel (0) target = $region9
    $region8: #{tpu_custom_call.1} parent=1 // pred_region
      _
    $region9: #{tpu_custom_call.1} parent=1 // pred_fallthru
      _
    // Predicated region
    $region10: #{tpu_custom_call.1} parent=1 // pred_check
      _
    $region11: #{tpu_custom_call.1} parent=1 // pred_check_branch
      %20 = sbr.rel (0) target = $region13
    $region12: #{tpu_custom_call.1} parent=1 // pred_region
      _
    $region13: #{tpu_custom_call.1} parent=1 // pred_fallthru
      _
    // Predicated region
    $region14: #{tpu_custom_call.1} parent=1 // pred_check
      _
    $region15: #{tpu_custom_call.1} parent=1 // pred_check_branch
      %22 = sbr.rel (0) target = $region17
    $region16: #{tpu_custom_call.1} parent=1 // pred_region
      %s24 = ssub.s32 768, 768
      %25 = vsyncadd [#allocation3], %s24
      %s26 = sshll.u32 [#allocation2], 4
      %s27 = int_to_ptr.vmem [resolvable:$true] %s26
      %32 = dma.hbm_to_vmem [thread:$0]  %s3, 768, %s27, [#allocation3], 256, 256, 16
    $region17: #{tpu_custom_call.1} parent=1 // pred_fallthru
      _
    // Predicated region
    $region18: #{tpu_custom_call.1} parent=1 // pred_check
      _
    $region19: #{tpu_custom_call.1} parent=1 // pred_check_branch
      %34 = sbr.rel (0) target = $region21
    $region20: #{tpu_custom_call.1} parent=1 // pred_region
      %35 = dma.done [#allocation3], 768
    $region21: #{tpu_custom_call.1} parent=1 // pred_fallthru
      _
    %v36 = vld [vmem:[%s0] sm:$0xff]
    %v37 = vld [vmem:[%s1] sm:$0xff]
    %v38 = vlaneseq
    %v39 = vand.u32 %v38, 127
    %40 = vset.pattern.permute.xlu0 0
    %41 = vperm.xlu0 %40, %v37
    %v42 = vpop.permute.xlu0 %41
    %vm43 = vcmp.eq.s32.totalorder %v42, %v39
    %v44 = vsel %vm43, 1, 0
    %v45 = vcvt.s32.f32 %v44
    %47 = vrot.lane.b32.xlu0 %v45, 16
    %v48 = vpop.permute.xlu0 %47
    %vm50 = vcmask 130048
    %v51 = vsel %vm50, %v36, %v48
    %v52 = vld [vmem:[#allocation2] sm:$0xff]
    %v53 = vld [vmem:[#allocation2 + $0x8] sm:$0xff]
    %v54 = vld [vmem:[#allocation2 + $0x10] sm:$0xff]
    %v55 = vld [vmem:[#allocation2 + $0x18] sm:$0xff]
    %v56 = vld [vmem:[#allocation2 + $0x20] sm:$0x7]
    %v57 = vld [vmem:[#allocation2 + $0x28] sm:$0x7]
    %vm58 = vcmask 154624
    %v60 = vsel %vm58, %v51, 0
    %vm62 = vcmask 1042432
    %v64 = vsel %vm62, %v56, 0
    %v67 = vsel %vm62, %v57, 0
    %69 = vmatprep.subr.mxu0 0.0
    %70 = vmatpush1.msra.mxu0 0.0
    %71 = vmatprep.subr.mxu0 0.0
    %72 = vmatpush1.msra.mxu0 0.0
    %73 = vmatprep.subr.mxu0 0.0
    %74 = vmatpush1.msra.mxu0 0.0
    %75 = vmatprep.subr.mxu0 0.0
    %76 = vmatpush1.msra.mxu0 0.0
    %77 = vmatprep.subr.mxu0 0.0
    %78 = vmatpush1.msra.mxu0 0.0
    %79 = vmatprep.subr.mxu0 0.0
    %80 = vmatpush1.msra.mxu0 0.0
    %81 = vmatprep.subr.mxu0 0.0
    %82 = vmatpush1.msra.mxu0 0.0
    %83 = vmatprep.subr.mxu0 0.0
    %84 = vmatpush1.msra.mxu0 0.0
    %85 = vmatprep.subr.mxu0 0.0
    %86 = vmatpush1.msra.mxu0 0.0
    %87 = vmatprep.subr.mxu0 0.0
    %88 = vmatpush1.msra.mxu0 0.0
    %89 = vmatprep.subr.mxu0 0.0
    %90 = vmatpush1.msra.mxu0 0.0
    %91 = vmatprep.subr.mxu0 0.0
    %92 = vmatpush1.msra.mxu0 0.0
    %93 = vmatprep.subr.mxu0 0.0
    %94 = vmatpush1.msra.mxu0 0.0
    %95 = vmatprep.subr.mxu0 %v67
    %96 = vmatpush1.msra.mxu0 %v64
    %97 = vmatprep.subr.mxu0 %v55
    %98 = vmatpush1.msra.mxu0 %v54
    %99 = vmatprep.subr.mxu0 %v53
    %100 = vmatpush1.msra.mxu0 %v52
    %101 = vmatprep.subr.mxu0 0.0
    %102 = vmatpush2.msra.mxu0 0.0
    %103 = vmatprep.subr.mxu0 0.0
    %104 = vmatpush2.msra.mxu0 0.0
    %105 = vmatprep.subr.mxu0 0.0
    %106 = vmatpush2.msra.mxu0 0.0
    %107 = vmatprep.subr.mxu0 0.0
    %108 = vmatpush2.msra.mxu0 0.0
    %109 = vmatprep.subr.mxu0 0.0
    %110 = vmatpush2.msra.mxu0 0.0
    %111 = vmatprep.subr.mxu0 0.0
    %112 = vmatpush2.msra.mxu0 0.0
    %113 = vmatprep.subr.mxu0 0.0
    %114 = vmatpush2.msra.mxu0 0.0
    %115 = vmatprep.subr.mxu0 0.0
    %116 = vmatpush2.msra.mxu0 0.0
    %117 = vmatprep.subr.mxu0 0.0
    %118 = vmatpush2.msra.mxu0 0.0
    %119 = vmatprep.subr.mxu0 0.0
    %120 = vmatpush2.msra.mxu0 0.0
    %121 = vmatprep.subr.mxu0 0.0
    %122 = vmatpush2.msra.mxu0 0.0
    %123 = vmatprep.subr.mxu0 0.0
    %124 = vmatpush2.msra.mxu0 0.0
    %125 = vmatprep.subr.mxu0 0.0
    %126 = vmatpush2.msra.mxu0 0.0
    %127 = vmatprep.subr.mxu0 0.0
    %128 = vmatpush2.msra.mxu0 0.0
    %129 = vmatprep.subr.mxu0 0.0
    %130 = vmatpush2.msra.mxu0 0.0
    %131 = vmatprep.subr.mxu0 0.0
    %132 = vmatpush2.msra.mxu0 0.0
    %133 = vmatprep.mubr.f32.mxu0 0.0
    %134 = vmatmul.mubr.f32.gmra.mxu0 %v60
    %v135 = vpop.f32.mrf.mxu0
    %v136 = vadd.f32 0.0, %v135
    %v137 = vpop.f32.mrf.mxu0
    %v138 = vadd.f32 0.0, %v137
    %139 = vdwg.mxu0
    %140 = vmax.xlane.f32.xlu0 %v136
    %v141 = vpop.xlane.xlu0 %140
    %v142 = vsub.f32 %v136, %v141
    %v143 = vmul.f32 %v142, 1.442695
    %v144 = vpow.pop %v143
    %145 = vadd.xlane.f32.xlu0 %v144
    %v146 = vpop.xlane.xlu0 %145
    %v147 = vrcp.pop %v146
    %v148 = vmul.f32 %v144, %v147
    %149 = vst [vmem:[#allocation5] sm:$0xff] %v148
    %v150 = vld [vmem:[%s2] sm:$0xff]
    %v151 = vmul.f32 %v150, 1.442695
    %v152 = vpow.pop %v151
    %154 = vset.pattern.permute.xlu0 0
    %155 = vperm.xlu0 %154, %v152
    %v156 = vpop.permute.xlu0 %155
    %v158 = vmul.f32 %v156, %v148
    %159 = vst [vmem:[#allocation6] sm:$0xff] %v158
    %160 = vst [vmem:[#allocation8] sm:$0xff] %v138
    // Predicated region
    $region22: #{tpu_custom_call.1} parent=1 // pred_check
      _
    $region23: #{tpu_custom_call.1} parent=1 // pred_check_branch
      %162 = sbr.rel (0) target = $region25
    $region24: #{tpu_custom_call.1} parent=1 // pred_region
      %s164 = ssub.s32 128, 128
      %165 = vsyncadd [#allocation4], %s164
      %s167 = sshll.u32 [#allocation5], 4
      %s168 = int_to_ptr.vmem [resolvable:$true] %s167
      %170 = dma.vmem_to_hbm [thread:$0]  %s168, 128, %s4, [#allocation4]
    $region25: #{tpu_custom_call.1} parent=1 // pred_fallthru
      _
    // Predicated region
    $region26: #{tpu_custom_call.1} parent=1 // pred_check
      _
    $region27: #{tpu_custom_call.1} parent=1 // pred_check_branch
      %172 = sbr.rel (0) target = $region29
    $region28: #{tpu_custom_call.1} parent=1 // pred_region
      %s174 = ssub.s32 128, 128
      %175 = vsyncadd [#allocation7], %s174
      %s177 = sshll.u32 [#allocation6], 4
      %s178 = int_to_ptr.vmem [resolvable:$true] %s177
      %180 = dma.vmem_to_hbm [thread:$0]  %s178, 128, %s5, [#allocation7]
    $region29: #{tpu_custom_call.1} parent=1 // pred_fallthru
      _
    // Predicated region
    $region30: #{tpu_custom_call.1} parent=1 // pred_check
      _
    $region31: #{tpu_custom_call.1} parent=1 // pred_check_branch
      %182 = sbr.rel (0) target = $region33
    $region32: #{tpu_custom_call.1} parent=1 // pred_region
      %s184 = ssub.s32 128, 128
      %185 = vsyncadd [#allocation7], %s184
      %s187 = sshll.u32 [#allocation8], 4
      %s188 = int_to_ptr.vmem [resolvable:$true] %s187
      %190 = dma.vmem_to_hbm [thread:$0]  %s188, 128, %s6, [#allocation7]
    $region33: #{tpu_custom_call.1} parent=1 // pred_fallthru
      _
    // Predicated region
    $region34: #{tpu_custom_call.1} parent=1 // pred_check
      _
    $region35: #{tpu_custom_call.1} parent=1 // pred_check_branch
      %192 = sbr.rel (0) target = $region37
    $region36: #{tpu_custom_call.1} parent=1 // pred_region
      %193 = dma.done [#allocation4], 128
    $region37: #{tpu_custom_call.1} parent=1 // pred_fallthru
      _
    // Predicated region
    $region38: #{tpu_custom_call.1} parent=1 // pred_check
      _
    $region39: #{tpu_custom_call.1} parent=1 // pred_check_branch
      %195 = sbr.rel (0) target = $region41
    $region40: #{tpu_custom_call.1} parent=1 // pred_region
      %196 = dma.done [#allocation7], 128
    $region41: #{tpu_custom_call.1} parent=1 // pred_fallthru
      _
    // Predicated region
    $region42: #{tpu_custom_call.1} parent=1 // pred_check
      _
    $region43: #{tpu_custom_call.1} parent=1 // pred_check_branch
      %198 = sbr.rel (0) target = $region45
    $region44: #{tpu_custom_call.1} parent=1 // pred_region
      %199 = dma.done [#allocation7], 128
    $region45: #{tpu_custom_call.1} parent=1 // pred_fallthru
      _
    %200 = vsyncpa [#allocation3], 1
    %201 = vsyncpa [#allocation4], 1
    %202 = vsyncpa [#allocation7], 1

// kernel: tpu_custom_call.1
$region0: #{tpu_custom_call.1}
  #allocation0 [shape = 'u32[]', space=smem, size = 0x4, offset = 0x4, fixed_abs, tag = 'smem constant byte address 0x4 - core index']
  #allocation1 [shape = 'u32[144,128]{1,0:T(1,128)}', space=vmem, size = 0x12000, scoped, tag = 'internal scratch']
  %s0 = inlined_call_operand.vmem [shape: f32[8,16], index: 0, kind: input, shape index: {}]
  %s1 = inlined_call_operand.vmem [shape: s32[8,1], index: 1, kind: input, shape index: {}]
  %s2 = inlined_call_operand.vmem [shape: f32[8,1], index: 2, kind: input, shape index: {}]
  %s3 = inlined_call_operand.hbm [shape: f32[19,256], index: 3, kind: input, shape index: {}]
  %s4 = inlined_call_operand.hbm [shape: f32[8,128], index: 4, kind: output, shape index: {0}]
  %s5 = inlined_call_operand.hbm [shape: f32[8,128], index: 5, kind: output, shape index: {1}]
  %s6 = inlined_call_operand.hbm [shape: f32[8,128], index: 6, kind: output, shape index: {2}]
  %7 = xla_tuple %s4, %s5, %s6
  %s8 = sld [smem:[#allocation0]]
  $region46: #{tpu_custom_call.1} parent=0
    _
  %s10 = ssub.s32 1, %s8
  %s11 = scalar_select 0, %s10, %s8
  $region1: #{tpu_custom_call.1} parent=0
    #allocation2 [shape = 'u8[24576]{0}', space=vmem, size = 0x6000, scoped, tag = 'input window, operand 3, single buffered']
    #allocation3 [shape = 's32[1]{0}', space=sflag, size = 0x4, scoped, tag = 'scoped memory for tpu_custom_call.1']
    #allocation4 [shape = 's32[1]{0}', space=sflag, size = 0x4, scoped, tag = 'scoped memory for tpu_custom_call.1']
    #allocation5 [shape = 'u8[4096]{0}', space=vmem, size = 0x1000, scoped, tag = 'output window, operand 0, single buffered']
    #allocation6 [shape = 'u8[4096]{0}', space=vmem, size = 0x1000, scoped, tag = 'output window, operand 1, single buffered']
    #allocation7 [shape = 's32[1]{0}', space=sflag, size = 0x4, scoped, tag = 'scoped memory for tpu_custom_call.1']
    #allocation8 [shape = 'u8[4096]{0}', space=vmem, size = 0x1000, scoped, tag = 'output window, operand 2, single buffered']
    %12 = vsyncpa [#allocation3], 0
    %13 = vsyncpa [#allocation4], 0
    %14 = vsyncpa [#allocation7], 0
    // Predicated region
    $region2: #{tpu_custom_call.1} parent=1 // pred_check
      _
    $region3: #{tpu_custom_call.1} parent=1 // pred_check_branch
      %16 = sbr.rel (0) target = $region5
    $region4: #{tpu_custom_call.1} parent=1 // pred_region
      _
    $region5: #{tpu_custom_call.1} parent=1 // pred_fallthru
      _
    // Predicated region
    $region6: #{tpu_custom_call.1} parent=1 // pred_check
      _
    $region7: #{tpu_custom_call.1} parent=1 // pred_check_branch
      %18 = sbr.rel (0) target = $region9
    $region8: #{tpu_custom_call.1} parent=1 // pred_region
      _
    $region9: #{tpu_custom_call.1} parent=1 // pred_fallthru
      _
    // Predicated region
    $region10: #{tpu_custom_call.1} parent=1 // pred_check
      _
    $region11: #{tpu_custom_call.1} parent=1 // pred_check_branch
      %20 = sbr.rel (0) target = $region13
    $region12: #{tpu_custom_call.1} parent=1 // pred_region
      _
    $region13: #{tpu_custom_call.1} parent=1 // pred_fallthru
      _
    // Predicated region
    $region14: #{tpu_custom_call.1} parent=1 // pred_check
      _
    $region15: #{tpu_custom_call.1} parent=1 // pred_check_branch
      %22 = sbr.rel (0) target = $region17
    $region16: #{tpu_custom_call.1} parent=1 // pred_region
      %s24 = ssub.s32 768, 768
      %25 = vsyncadd [#allocation3], %s24
      %s26 = sshll.u32 [#allocation2], 4
      %s27 = int_to_ptr.vmem [resolvable:$true] %s26
      %32 = dma.hbm_to_vmem [thread:$0]  %s3, 768, %s27, [#allocation3], 256, 256, 16
    $region17: #{tpu_custom_call.1} parent=1 // pred_fallthru
      _
    // Predicated region
    $region18: #{tpu_custom_call.1} parent=1 // pred_check
      _
    $region19: #{tpu_custom_call.1} parent=1 // pred_check_branch
      %34 = sbr.rel (0) target = $region21
    $region20: #{tpu_custom_call.1} parent=1 // pred_region
      %35 = dma.done [#allocation3], 768
    $region21: #{tpu_custom_call.1} parent=1 // pred_fallthru
      _
    %v36 = vld [vmem:[%s0] sm:$0xff]
    %v37 = vld [vmem:[%s1] sm:$0xff]
    %v38 = vlaneseq
    %v39 = vand.u32 %v38, 127
    %40 = vset.pattern.permute.xlu0 0
    %41 = vperm.xlu0 %40, %v37
    %v42 = vpop.permute.xlu0 %41
    %vm43 = vcmp.eq.s32.totalorder %v42, %v39
    %v44 = vsel %vm43, 1, 0
    %v45 = vcvt.s32.f32 %v44
    %47 = vrot.lane.b32.xlu0 %v45, 16
    %v48 = vpop.permute.xlu0 %47
    %vm50 = vcmask 130048
    %v51 = vsel %vm50, %v36, %v48
    %v52 = vld [vmem:[#allocation2] sm:$0xff]
    %v53 = vld [vmem:[#allocation2 + $0x8] sm:$0xff]
    %v54 = vld [vmem:[#allocation2 + $0x10] sm:$0xff]
    %v55 = vld [vmem:[#allocation2 + $0x18] sm:$0xff]
    %v56 = vld [vmem:[#allocation2 + $0x20] sm:$0x7]
    %v57 = vld [vmem:[#allocation2 + $0x28] sm:$0x7]
    %vm58 = vcmask 154624
    %v60 = vsel %vm58, %v51, 0
    %vm62 = vcmask 1042432
    %v64 = vsel %vm62, %v56, 0
    %v67 = vsel %vm62, %v57, 0
    %69 = vmatprep.subr.mxu0 0.0
    %70 = vmatpush1.msra.mxu0 0.0
    %71 = vmatprep.subr.mxu0 0.0
    %72 = vmatpush1.msra.mxu0 0.0
    %73 = vmatprep.subr.mxu0 0.0
    %74 = vmatpush1.msra.mxu0 0.0
    %75 = vmatprep.subr.mxu0 0.0
    %76 = vmatpush1.msra.mxu0 0.0
    %77 = vmatprep.subr.mxu0 0.0
    %78 = vmatpush1.msra.mxu0 0.0
    %79 = vmatprep.subr.mxu0 0.0
    %80 = vmatpush1.msra.mxu0 0.0
    %81 = vmatprep.subr.mxu0 0.0
    %82 = vmatpush1.msra.mxu0 0.0
    %83 = vmatprep.subr.mxu0 0.0
    %84 = vmatpush1.msra.mxu0 0.0
    %85 = vmatprep.subr.mxu0 0.0
    %86 = vmatpush1.msra.mxu0 0.0
    %87 = vmatprep.subr.mxu0 0.0
    %88 = vmatpush1.msra.mxu0 0.0
    %89 = vmatprep.subr.mxu0 0.0
    %90 = vmatpush1.msra.mxu0 0.0
    %91 = vmatprep.subr.mxu0 0.0
    %92 = vmatpush1.msra.mxu0 0.0
    %93 = vmatprep.subr.mxu0 0.0
    %94 = vmatpush1.msra.mxu0 0.0
    %95 = vmatprep.subr.mxu0 %v67
    %96 = vmatpush1.msra.mxu0 %v64
    %97 = vmatprep.subr.mxu0 %v55
    %98 = vmatpush1.msra.mxu0 %v54
    %99 = vmatprep.subr.mxu0 %v53
    %100 = vmatpush1.msra.mxu0 %v52
    %101 = vmatprep.subr.mxu0 0.0
    %102 = vmatpush2.msra.mxu0 0.0
    %103 = vmatprep.subr.mxu0 0.0
    %104 = vmatpush2.msra.mxu0 0.0
    %105 = vmatprep.subr.mxu0 0.0
    %106 = vmatpush2.msra.mxu0 0.0
    %107 = vmatprep.subr.mxu0 0.0
    %108 = vmatpush2.msra.mxu0 0.0
    %109 = vmatprep.subr.mxu0 0.0
    %110 = vmatpush2.msra.mxu0 0.0
    %111 = vmatprep.subr.mxu0 0.0
    %112 = vmatpush2.msra.mxu0 0.0
    %113 = vmatprep.subr.mxu0 0.0
    %114 = vmatpush2.msra.mxu0 0.0
    %115 = vmatprep.subr.mxu0 0.0
    %116 = vmatpush2.msra.mxu0 0.0
    %117 = vmatprep.subr.mxu0 0.0
    %118 = vmatpush2.msra.mxu0 0.0
    %119 = vmatprep.subr.mxu0 0.0
    %120 = vmatpush2.msra.mxu0 0.0
    %121 = vmatprep.subr.mxu0 0.0
    %122 = vmatpush2.msra.mxu0 0.0
    %123 = vmatprep.subr.mxu0 0.0
    %124 = vmatpush2.msra.mxu0 0.0
    %125 = vmatprep.subr.mxu0 0.0
    %126 = vmatpush2.msra.mxu0 0.0
    %127 = vmatprep.subr.mxu0 0.0
    %128 = vmatpush2.msra.mxu0 0.0
    %129 = vmatprep.subr.mxu0 0.0
    %130 = vmatpush2.msra.mxu0 0.0
    %131 = vmatprep.subr.mxu0 0.0
    %132 = vmatpush2.msra.mxu0 0.0
    %133 = vmatprep.mubr.f32.mxu0 0.0
    %134 = vmatmul.mubr.f32.gmra.mxu0 %v60
    %v135 = vpop.f32.mrf.mxu0
    %v136 = vadd.f32 0.0, %v135
    %v137 = vpop.f32.mrf.mxu0
    %v138 = vadd.f32 0.0, %v137
    %139 = vdwg.mxu0
    %140 = vmax.xlane.f32.xlu0 %v136
    %v141 = vpop.xlane.xlu0 %140
    %v142 = vsub.f32 %v136, %v141
    %v143 = vmul.f32 %v142, 1.442695
    %v144 = vpow.pop %v143
    %145 = vadd.xlane.f32.xlu0 %v144
    %v146 = vpop.xlane.xlu0 %145
    %v147 = vrcp.pop %v146
    %v148 = vmul.f32 %v144, %v147
    %149 = vst [vmem:[#allocation5] sm:$0xff] %v148
    %v150 = vld [vmem:[%s2] sm:$0xff]
    %v151 = vmul.f32 %v150, 1.442695
    %v152 = vpow.pop %v151
    %154 = vset.pattern.permute.xlu0 0
    %155 = vperm.xlu0 %154, %v152
    %v156 = vpop.permute.xlu0 %155
    %v158 = vmul.f32 %v156, %v148
    %159 = vst [vmem:[#allocation6] sm:$0xff] %v158
    %160 = vst [vmem:[#allocation8] sm:$0xff] %v138
    // Predicated region
    $region22: #{tpu_custom_call.1} parent=1 // pred_check
      _
    $region23: #{tpu_custom_call.1} parent=1 // pred_check_branch
      %162 = sbr.rel (0) target = $region25
    $region24: #{tpu_custom_call.1} parent=1 // pred_region
      %s164 = ssub.s32 128, 128
      %165 = vsyncadd [#allocation4], %s164
      %s167 = sshll.u32 [#allocation5], 4
      %s168 = int_to_ptr.vmem [resolvable:$true] %s167
      %170 = dma.vmem_to_hbm [thread:$0]  %s168, 128, %s4, [#allocation4]
    $region25: #{tpu_custom_call.1} parent=1 // pred_fallthru
      _
    // Predicated region
    $region26: #{tpu_custom_call.1} parent=1 // pred_check
      _
    $region27: #{tpu_custom_call.1} parent=1 // pred_check_branch
      %172 = sbr.rel (0) target = $region29
    $region28: #{tpu_custom_call.1} parent=1 // pred_region
      %s174 = ssub.s32 128, 128
      %175 = vsyncadd [#allocation7], %s174
      %s177 = sshll.u32 [#allocation6], 4
      %s178 = int_to_ptr.vmem [resolvable:$true] %s177
      %180 = dma.vmem_to_hbm [thread:$0]  %s178, 128, %s5, [#allocation7]
    $region29: #{tpu_custom_call.1} parent=1 // pred_fallthru
      _
    // Predicated region
    $region30: #{tpu_custom_call.1} parent=1 // pred_check
      _
    $region31: #{tpu_custom_call.1} parent=1 // pred_check_branch
      %182 = sbr.rel (0) target = $region33
    $region32: #{tpu_custom_call.1} parent=1 // pred_region
      %s184 = ssub.s32 128, 128
      %185 = vsyncadd [#allocation7], %s184
      %s187 = sshll.u32 [#allocation8], 4
      %s188 = int_to_ptr.vmem [resolvable:$true] %s187
      %190 = dma.vmem_to_hbm [thread:$0]  %s188, 128, %s6, [#allocation7]
    $region33: #{tpu_custom_call.1} parent=1 // pred_fallthru
      _
    // Predicated region
    $region34: #{tpu_custom_call.1} parent=1 // pred_check
      _
    $region35: #{tpu_custom_call.1} parent=1 // pred_check_branch
      %192 = sbr.rel (0) target = $region37
    $region36: #{tpu_custom_call.1} parent=1 // pred_region
      %193 = dma.done [#allocation4], 128
    $region37: #{tpu_custom_call.1} parent=1 // pred_fallthru
      _
    // Predicated region
    $region38: #{tpu_custom_call.1} parent=1 // pred_check
      _
    $region39: #{tpu_custom_call.1} parent=1 // pred_check_branch
      %195 = sbr.rel (0) target = $region41
    $region40: #{tpu_custom_call.1} parent=1 // pred_region
      %196 = dma.done [#allocation7], 128
    $region41: #{tpu_custom_call.1} parent=1 // pred_fallthru
      _
    // Predicated region
    $region42: #{tpu_custom_call.1} parent=1 // pred_check
      _
    $region43: #{tpu_custom_call.1} parent=1 // pred_check_branch
      %198 = sbr.rel (0) target = $region45
    $region44: #{tpu_custom_call.1} parent=1 // pred_region
      %199 = dma.done [#allocation7], 128
    $region45: #{tpu_custom_call.1} parent=1 // pred_fallthru
      _
    %200 = vsyncpa [#allocation3], 1
    %201 = vsyncpa [#allocation4], 1
    %202 = vsyncpa [#allocation7], 1

</llo_original>
